<compile_context>
chip_gen: v7x
topology: tpu7x:2x2x1
jax: 0.10.0
libtpu: 0.0.40
codegen_flags: <defaults>
</compile_context>

<pallas_src>
import functools

import jax
import jax.numpy as jnp
from jax.experimental import pallas as pl
from jax.experimental.pallas import tpu as pltpu


def _round_up(x, m):
    return (x + m - 1) // m * m


_TM = 256   # M tile for the plain matmul path (full-extent block when M <= _TM)
_TN = 128   # output-channel tile: lane-dense stores + parallel extent for v7x


def _pick_vmem_limit():
    # Per-generation scoped-VMEM budget: ~3/4 of physical, capped at 96 MiB
    # (v5e/v6e 128 MiB parts) -> ~48 MiB on v7x (64 MiB part).
    try:
        cap = pltpu.get_tpu_info().vmem_capacity_bytes
        return int(min(cap * 3 // 4, 96 * 1024 * 1024))
    except Exception:
        return 32 * 1024 * 1024


_VMEM_LIMIT = _pick_vmem_limit()


# ---------------------------------------------------------------------------
# Fast-path matmul kernel: out = [relu]( X @ W + bias [+ residual] )
# Single-shot (full K block, no accumulator scratch, no pl.when).
# ---------------------------------------------------------------------------
def _matmul_bias_kernel(x_ref, w_ref, b_ref, o_ref, *, relu):
    out = jnp.dot(x_ref[...], w_ref[...],
                  preferred_element_type=jnp.float32) + b_ref[...]
    if relu:
        out = jnp.maximum(out, 0.0)
    o_ref[...] = out.astype(o_ref.dtype)


def _matmul_bias_res_kernel(x_ref, w_ref, b_ref, r_ref, o_ref, *, relu):
    out = (jnp.dot(x_ref[...], w_ref[...], preferred_element_type=jnp.float32)
           + b_ref[...] + r_ref[...].astype(jnp.float32))
    if relu:
        out = jnp.maximum(out, 0.0)
    o_ref[...] = out.astype(o_ref.dtype)


def matmul_bias(x, w, bias, residual=None, relu=False, out_dtype=jnp.bfloat16):
    """relu?( x @ w + bias (+ residual) ).  w/bias are pre-padded to N%128==0."""
    M, K = x.shape
    K2, N = w.shape
    assert K == K2 and N % _TN == 0
    tn = _TN
    nn = N // tn
    if M <= _TM:
        tm, mp = M, M                       # full-extent M block, no pad
    else:
        tm = _TM
        mp = _round_up(M, tm)
    nm = mp // tm

    xp = x.astype(jnp.bfloat16)
    if mp != M:
        xp = jnp.pad(xp, ((0, mp - M), (0, 0)))

    # Grid (j, i) with the M axis innermost: the (K, tn) weight / bias blocks
    # are index-map independent of i, so they stay VMEM-resident across the
    # whole M sweep (streamed once per N tile).
    in_specs = [
        pl.BlockSpec((tm, K), lambda j, i: (i, 0)),
        pl.BlockSpec((K, tn), lambda j, i: (0, j)),
        pl.BlockSpec((1, tn), lambda j, i: (0, j)),
    ]
    inputs = [xp, w, bias]
    if residual is not None:
        rp = residual.astype(jnp.bfloat16)
        if mp != M:
            rp = jnp.pad(rp, ((0, mp - M), (0, 0)))
        in_specs.append(pl.BlockSpec((tm, tn), lambda j, i: (i, j)))
        inputs.append(rp)
        kernel = functools.partial(_matmul_bias_res_kernel, relu=relu)
    else:
        kernel = functools.partial(_matmul_bias_kernel, relu=relu)

    out = pl.pallas_call(
        kernel,
        out_shape=jax.ShapeDtypeStruct((mp, N), out_dtype),
        grid=(nn, nm),
        in_specs=in_specs,
        out_specs=pl.BlockSpec((tm, tn), lambda j, i: (i, j)),
        compiler_params=pltpu.CompilerParams(
            dimension_semantics=("parallel", "parallel"),
            vmem_limit_bytes=_VMEM_LIMIT,
        ),
    )(*inputs)
    if mp != M:
        out = out[:M]
    return out


# ---------------------------------------------------------------------------
# Fused conv kernel: in-kernel im2col (per-tap matmuls) + BN bias (+ residual)
# (+ ReLU).  One grid step = one image x one 128-wide output-channel tile.
# taps: tuple of (dh, dw, c0) static offsets into the prepared input block;
# weight rows for tap t are w_ref[t*cin:(t+1)*cin, :].
# ---------------------------------------------------------------------------
def _conv_taps_matmul(x_ref, w_ref, taps, cin, oh, ow):
    x = x_ref[0]                                        # (XH, XW, XC)
    acc = None
    for t, (dh, dw, c0) in enumerate(taps):
        patch = x[dh:dh + oh, dw:dw + ow, c0:c0 + cin].reshape(oh * ow, cin)
        d = jnp.dot(patch, w_ref[t * cin:(t + 1) * cin, :],
                    preferred_element_type=jnp.float32)
        acc = d if acc is None else acc + d
    return acc


def _fused_conv_kernel(x_ref, w_ref, b_ref, o_ref, *, taps, cin, oh, ow, relu):
    out = _conv_taps_matmul(x_ref, w_ref, taps, cin, oh, ow) + b_ref[...]
    if relu:
        out = jnp.maximum(out, 0.0)
    o_ref[0] = out.astype(o_ref.dtype)


def _fused_conv_res_kernel(x_ref, w_ref, b_ref, r_ref, o_ref, *,
                           taps, cin, oh, ow, relu):
    out = (_conv_taps_matmul(x_ref, w_ref, taps, cin, oh, ow) + b_ref[...]
           + r_ref[0].astype(jnp.float32))
    if relu:
        out = jnp.maximum(out, 0.0)
    o_ref[0] = out.astype(o_ref.dtype)


def _fused_conv(xprep, p, oh, ow, taps, residual, relu):
    n, xh, xw, xc = xprep.shape
    cin, ocp = p["cin"], p["ocp"]
    ktot = p["wmat"].shape[0]
    tn = _TN
    nn = ocp // tn

    in_specs = [
        pl.BlockSpec((1, xh, xw, xc), lambda b, j: (b, 0, 0, 0)),   # image
        pl.BlockSpec((ktot, tn), lambda b, j: (0, j)),              # weights
        pl.BlockSpec((1, tn), lambda b, j: (0, j)),                 # BN bias
    ]
    inputs = [xprep, p["wmat"], p["bias"]]
    if residual is not None:
        in_specs.append(pl.BlockSpec((1, oh * ow, tn), lambda b, j: (b, 0, j)))
        inputs.append(residual)
        kernel = functools.partial(_fused_conv_res_kernel, taps=taps, cin=cin,
                                   oh=oh, ow=ow, relu=relu)
    else:
        kernel = functools.partial(_fused_conv_kernel, taps=taps, cin=cin,
                                   oh=oh, ow=ow, relu=relu)

    return pl.pallas_call(
        kernel,
        out_shape=jax.ShapeDtypeStruct((n, oh * ow, ocp), jnp.bfloat16),
        grid=(n, nn),   # batch outer, oc-tile inner: image block stays resident
        in_specs=in_specs,
        out_specs=pl.BlockSpec((1, oh * ow, tn), lambda b, j: (b, 0, j)),
        compiler_params=pltpu.CompilerParams(
            dimension_semantics=("parallel", "parallel"),
            vmem_limit_bytes=_VMEM_LIMIT,
        ),
    )(*inputs)


# ---------------------------------------------------------------------------
# Conv wrappers (activations are NHWC bf16 with channels padded to 128-mult)
# ---------------------------------------------------------------------------
def conv3x3(x, p, *, stride, relu, residual=None):
    """3x3 conv, pad=1, folded BN (+ residual, + ReLU); in-kernel im2col."""
    n, h, w, c = x.shape
    cin, ocp = p["cin"], p["ocp"]
    assert c == cin
    oh = (h + 2 - 3) // stride + 1
    ow = (w + 2 - 3) // stride + 1
    xpad = jnp.pad(x, ((0, 0), (1, 1), (1, 1), (0, 0)))

    if stride == 1:
        xprep = xpad
        taps = tuple((ki, kj, 0) for ki in range(3) for kj in range(3))
    else:
        assert stride == 2 and h % 2 == 0 and w % 2 == 0
        # Stride-phase stack: 4 phases concatenated on channels (~1x traffic).
        phases = [xpad[:, a::2, b::2, :] for a in (0, 1) for b in (0, 1)]
        xprep = jnp.concatenate(phases, axis=-1)
        taps = tuple((ki // 2, kj // 2, ((ki % 2) * 2 + (kj % 2)) * cin)
                     for ki in range(3) for kj in range(3))

    res2 = None if residual is None else residual.reshape(n, oh * ow, ocp)
    try:
        out = _fused_conv(xprep, p, oh, ow, taps, res2, relu)
    except Exception:
        # Robustness guard: if the fused in-kernel-im2col variant fails to
        # lower on this toolchain, fall back to host im2col + fast-path matmul.
        pats = [xpad[:, ki:ki + stride * oh:stride, kj:kj + stride * ow:stride, :]
                for ki in range(3) for kj in range(3)]
        pat = jnp.concatenate(pats, axis=-1).reshape(n * oh * ow, 9 * cin)
        r = None if residual is None else residual.reshape(n * oh * ow, ocp)
        out = matmul_bias(pat, p["wmat"], p["bias"], residual=r,
                          relu=relu).reshape(n, oh * ow, ocp)
    return out.reshape(n, oh, ow, ocp)


def conv1x1(x, p, *, stride):
    """1x1 (downsample) conv + folded BN: host subsample + fast-path matmul."""
    n, h, w, c = x.shape
    assert c == p["cin"]
    xs = x[:, ::stride, ::stride, :]
    oh, ow = xs.shape[1], xs.shape[2]
    out = matmul_bias(xs.reshape(n * oh * ow, c), p["wmat"], p["bias"],
                      relu=False)
    return out.reshape(n, oh, ow, p["ocp"])


def stem_conv(x, p):
    """Stem 3x3 stride-2 conv (Cin=3): host im2col (K=27) + fast-path matmul."""
    n, h, w, c = x.shape
    s = 2
    oh = (h + 2 - 3) // s + 1
    ow = (w + 2 - 3) // s + 1
    xp = jnp.pad(x, ((0, 0), (1, 1), (1, 1), (0, 0)))
    pats = [xp[:, ki:ki + s * oh:s, kj:kj + s * ow:s, :]
            for ki in range(3) for kj in range(3)]
    pat = jnp.concatenate(pats, axis=-1).reshape(n * oh * ow, 9 * c)
    out = matmul_bias(pat, p["wmat"], p["bias"], relu=True)
    return out.reshape(n, oh, ow, p["ocp"])


# ---------------------------------------------------------------------------
# Parameter construction + one-time prep (deterministic, synthetic weights)
# ---------------------------------------------------------------------------
def _bn_fold(key, c, eps=1e-5):
    k1, k2, k3, k4 = jax.random.split(key, 4)
    gamma = jax.random.uniform(k1, (c,), minval=0.5, maxval=1.5)
    beta = jax.random.normal(k2, (c,)) * 0.1
    rmean = jax.random.normal(k3, (c,)) * 0.1
    rvar = jax.random.uniform(k4, (c,), minval=0.5, maxval=1.5)
    scale = gamma / jnp.sqrt(rvar + eps)
    bias = beta - rmean * scale
    return scale, bias


def _prep_conv(w, scale, bias, icp=None):
    """Fold BN scale into an im2col weight matrix, pad channels to 128-mult."""
    oc, ic, kh, kw = w.shape
    ocp = _round_up(oc, 128)
    if icp is None:
        icp = _round_up(ic, 128)
    wm = jnp.transpose(w, (2, 3, 1, 0)) * scale[None, None, None, :]
    wm = jnp.pad(wm, ((0, 0), (0, 0), (0, icp - ic), (0, ocp - oc)))
    return {
        "wmat": wm.reshape(kh * kw * icp, ocp).astype(jnp.bfloat16),
        "bias": jnp.pad(bias, (0, ocp - oc)).reshape(1, ocp).astype(jnp.float32),
        "cin": icp,
        "ocp": ocp,
    }


def _make_basic_block(key, in_c, out_c, stride):
    keys = jax.random.split(key, 6)
    w1 = jax.random.normal(keys[0], (out_c, in_c, 3, 3)) * 0.05
    s1, b1 = _bn_fold(keys[1], out_c)
    w2 = jax.random.normal(keys[2], (out_c, out_c, 3, 3)) * 0.05
    s2, b2 = _bn_fold(keys[3], out_c)
    p = {
        "stride": stride,
        "conv1": _prep_conv(w1, s1, b1),
        "conv2": _prep_conv(w2, s2, b2),
    }
    if stride != 1 or in_c != out_c:  # BasicBlock.expansion == 1
        wd = jax.random.normal(keys[4], (out_c, in_c, 1, 1)) * 0.05
        sd, bd = _bn_fold(keys[5], out_c)
        p["downsample"] = _prep_conv(wd, sd, bd)
    return p


def make_resnet_params(key, blocks_num=(1, 1, 1, 1), num_classes=10):
    keys = jax.random.split(key, 8)
    conv1_w = jax.random.normal(keys[0], (64, 3, 3, 3)) * 0.05
    s, b = _bn_fold(keys[1], 64)
    params = {"stem": _prep_conv(conv1_w, s, b, icp=3)}
    layers = []
    in_c = 64
    layer_cfg = [(64, blocks_num[0], 1), (128, blocks_num[1], 2),
                 (256, blocks_num[2], 2), (512, blocks_num[3], 2)]
    for li, (ch, nblk, stride) in enumerate(layer_cfg):
        blk_keys = jax.random.split(keys[2 + li], nblk)
        layer = []
        for bi in range(nblk):
            st = stride if bi == 0 else 1
            layer.append(_make_basic_block(blk_keys[bi], in_c, ch, st))
            in_c = ch
        layers.append(layer)
    params["layers"] = layers
    params["fc_w"] = jax.random.normal(keys[6], (num_classes, 512)) * 0.05
    params["fc_b"] = jax.random.normal(keys[7], (num_classes,)) * 0.1
    return params


# ---------------------------------------------------------------------------
# Forward pass
# ---------------------------------------------------------------------------
def basic_block_forward(x, p):
    stride = p["stride"]
    if "downsample" in p:
        identity = conv1x1(x, p["downsample"], stride=stride)
    else:
        identity = x
    out = conv3x3(x, p["conv1"], stride=stride, relu=True)
    # conv2 -> bn2 -> (+ identity) -> relu fused into one Pallas call
    out = conv3x3(out, p["conv2"], stride=1, relu=True, residual=identity)
    return out


def resnet_forward(x_nchw, params):
    x = jnp.transpose(x_nchw, (0, 2, 3, 1)).astype(jnp.bfloat16)  # NCHW->NHWC
    x = stem_conv(x, params["stem"])
    for layer in params["layers"]:
        for blk in layer:
            x = basic_block_forward(x, blk)
    # layer4 output channels are exactly 512 (no padding at this width).
    x = jnp.mean(x.astype(jnp.float32), axis=(1, 2))  # AdaptiveAvgPool+flatten
    # Tiny (2 x 512 x 10) FC: a dedicated Pallas call is pure overhead here.
    return x @ params["fc_w"].T.astype(jnp.float32) + params["fc_b"]


if __name__ == "__main__":
    key = jax.random.PRNGKey(0)
    k_param, k_input = jax.random.split(key)
    params = make_resnet_params(k_param, blocks_num=(1, 1, 1, 1),
                                num_classes=10)

    # Small NCHW input, consistent with nn.Conv2d(3, 64, ...) at the stem.
    x = jax.random.normal(k_input, (2, 3, 16, 16), dtype=jnp.float32)

    out = resnet_forward(x, params)
    out = jax.block_until_ready(out)
    assert out.shape == (2, 10), out.shape
    assert jnp.all(jnp.isfinite(out))
    print("KERNEL_OK")
</pallas_src>

<mosaic_0001>
module attributes {stable_mosaic.version = 11 : i64} {
  func.func @_matmul_bias_kernel(%arg0: i32, %arg1: i32, %arg2: memref<128x27xbf16, #tpu.memory_space<vmem>>, %arg3: memref<27x128xbf16, #tpu.memory_space<vmem>>, %arg4: memref<1x128xf32, #tpu.memory_space<vmem>>, %arg5: memref<128x128xbf16, #tpu.memory_space<vmem>>) attributes {dimension_semantics = [#tpu.dimension_semantics<parallel>, #tpu.dimension_semantics<parallel>], iteration_bounds = array<i64: 1, 1>, scalar_prefetch = 0 : i64, scratch_operands = 0 : i64, tpu.core_type = #tpu.core_type<tc>, window_params = [{transform_indices = @transform_0, window_bounds = array<i64: 128, 27>}, {transform_indices = @transform_1, window_bounds = array<i64: 27, 128>}, {transform_indices = @transform_2, window_bounds = array<i64: 1, 128>}, {transform_indices = @transform_3, window_bounds = array<i64: 128, 128>}]} {
    %c0 = arith.constant 0 : index
    %c0_0 = arith.constant 0 : index
    %0 = vector.load %arg2[%c0, %c0_0] : memref<128x27xbf16, #tpu.memory_space<vmem>>, vector<128x27xbf16>
    %c0_1 = arith.constant 0 : index
    %c0_2 = arith.constant 0 : index
    %1 = vector.load %arg3[%c0_1, %c0_2] : memref<27x128xbf16, #tpu.memory_space<vmem>>, vector<27x128xbf16>
    %cst = arith.constant dense<0.000000e+00> : vector<128x128xf32>
    %2 = tpu.matmul %0, %1, %cst {dimension_numbers = #tpu.dot_dimension_numbers<[1], [0], [0], [1], [0, 0, 1, 1], [], []>} : vector<128x27xbf16>, vector<27x128xbf16>, vector<128x128xf32> -> vector<128x128xf32>
    %c0_3 = arith.constant 0 : index
    %c0_4 = arith.constant 0 : index
    %3 = vector.load %arg4[%c0_3, %c0_4] : memref<1x128xf32, #tpu.memory_space<vmem>>, vector<1x128xf32>
    %4 = vector.broadcast %3 : vector<1x128xf32> to vector<128x128xf32>
    %5 = arith.addf %2, %4 : vector<128x128xf32>
    %cst_5 = arith.constant 0.000000e+00 : f32
    %6 = vector.broadcast %cst_5 : f32 to vector<128x128xf32>
    %7 = arith.maximumf %5, %6 : vector<128x128xf32>
    %8 = arith.truncf %7 : vector<128x128xf32> to vector<128x128xbf16>
    %c0_6 = arith.constant 0 : index
    %c0_7 = arith.constant 0 : index
    %9 = vector.load %arg5[%c0_6, %c0_7] : memref<128x128xbf16, #tpu.memory_space<vmem>>, vector<128x128xbf16>
    tpu.vector_store %arg5[%c0_6, %c0_7], %8 {strides = array<i32>} : memref<128x128xbf16, #tpu.memory_space<vmem>>, vector<128x128xbf16>,
    return
  }
  func.func @transform_0(%arg0: i32, %arg1: i32) -> (i32, i32) {
    %c0_i32 = arith.constant 0 : i32
    %c0_i32_0 = arith.constant 0 : i32
    return %arg1, %c0_i32 : i32, i32
  }
  func.func @transform_1(%arg0: i32, %arg1: i32) -> (i32, i32) {
    %c0_i32 = arith.constant 0 : i32
    %c0_i32_0 = arith.constant 0 : i32
    return %c0_i32, %arg0 : i32, i32
  }
  func.func @transform_2(%arg0: i32, %arg1: i32) -> (i32, i32) {
    %c0_i32 = arith.constant 0 : i32
    %c0_i32_0 = arith.constant 0 : i32
    return %c0_i32, %arg0 : i32, i32
  }
  func.func @transform_3(%arg0: i32, %arg1: i32) -> (i32, i32) {
    %c0_i32 = arith.constant 0 : i32
    return %arg1, %arg0 : i32, i32
  }
}

</mosaic_0001>

<llo_original>
// kernel: tpu_custom_call.1
$region0: #{tpu_custom_call.1}
  #allocation0 [shape = 'u32[]', space=smem, size = 0x4, offset = 0x4, fixed_abs, tag = 'smem constant byte address 0x4 - core index']
  #allocation1 [shape = 'u32[144,128]{1,0:T(1,128)}', space=vmem, size = 0x12000, scoped, tag = 'internal scratch']
  %s0 = inlined_call_operand.vmem [shape: bf16[128,27], index: 0, kind: input, shape index: {}]
  %s1 = inlined_call_operand.vmem [shape: bf16[27,128], index: 1, kind: input, shape index: {}]
  %s2 = inlined_call_operand.vmem [shape: f32[1,128], index: 2, kind: input, shape index: {}]
  %s3 = inlined_call_operand.hbm [shape: bf16[128,128], index: 3, kind: output, shape index: {}]
  %s4 = sld [smem:[#allocation0]]
  $region22: #{tpu_custom_call.1} parent=0
    _
  %s6 = ssub.s32 1, %s4
  %s7 = scalar_select 0, %s6, %s4
  $region1: #{tpu_custom_call.1} parent=0
    #allocation2 [shape = 'u8[32768]{0}', space=vmem, size = 0x8000, scoped, tag = 'output window, operand 0, single buffered']
    #allocation3 [shape = 's32[1]{0}', space=sflag, size = 0x4, scoped, tag = 'scoped memory for tpu_custom_call.1']
    %8 = vsyncpa [#allocation3], 0
    // Predicated region
    $region2: #{tpu_custom_call.1} parent=1 // pred_check
      _
    $region3: #{tpu_custom_call.1} parent=1 // pred_check_branch
      %10 = sbr.rel (0) target = $region5
    $region4: #{tpu_custom_call.1} parent=1 // pred_region
      _
    $region5: #{tpu_custom_call.1} parent=1 // pred_fallthru
      _
    // Predicated region
    $region6: #{tpu_custom_call.1} parent=1 // pred_check
      _
    $region7: #{tpu_custom_call.1} parent=1 // pred_check_branch
      %12 = sbr.rel (0) target = $region9
    $region8: #{tpu_custom_call.1} parent=1 // pred_region
      _
    $region9: #{tpu_custom_call.1} parent=1 // pred_fallthru
      _
    // Predicated region
    $region10: #{tpu_custom_call.1} parent=1 // pred_check
      _
    $region11: #{tpu_custom_call.1} parent=1 // pred_check_branch
      %14 = sbr.rel (0) target = $region13
    $region12: #{tpu_custom_call.1} parent=1 // pred_region
      _
    $region13: #{tpu_custom_call.1} parent=1 // pred_fallthru
      _
    %v16 = vld [vmem:[%s0] sm:$0xf]
    %v17 = vld [vmem:[%s0 + $0x4] sm:$0xf]
    %v18 = vld [vmem:[%s0 + $0x8] sm:$0xf]
    %v19 = vld [vmem:[%s0 + $0xc] sm:$0xf]
    %v20 = vld [vmem:[%s0 + $0x10] sm:$0xf]
    %v21 = vld [vmem:[%s0 + $0x14] sm:$0xf]
    %v22 = vld [vmem:[%s0 + $0x18] sm:$0xf]
    %v23 = vld [vmem:[%s0 + $0x1c] sm:$0xf]
    %v24 = vld [vmem:[%s0 + $0x20] sm:$0xf]
    %v25 = vld [vmem:[%s0 + $0x24] sm:$0xf]
    %v26 = vld [vmem:[%s0 + $0x28] sm:$0xf]
    %v27 = vld [vmem:[%s0 + $0x2c] sm:$0xf]
    %v28 = vld [vmem:[%s0 + $0x30] sm:$0xf]
    %v29 = vld [vmem:[%s0 + $0x34] sm:$0xf]
    %v30 = vld [vmem:[%s0 + $0x38] sm:$0xf]
    %v31 = vld [vmem:[%s0 + $0x3c] sm:$0xf]
    %v32 = vld [vmem:[%s1] sm:$0xf]
    %v33 = vld [vmem:[%s1 + $0x4] sm:$0xf]
    %v34 = vld [vmem:[%s1 + $0x8] sm:$0xf]
    %v35 = vld [vmem:[%s1 + $0xc] sm:$0x3]
    %v36 = vld [vmem:[%s2] sm:$0x1]
    %v38 = vlaneseq
    %v39 = vshrl.u32 %v38, 7
    %v40 = vsub.s32 0, %v39
    %v41 = vrot.slane %v36, %v40
    %v59 = vunpack.c.l.b16 %v16
    %v60 = vunpack.c.l.b16 %v17
    %v61 = vunpack.c.l.b16 %v18
    %v62 = vunpack.c.l.b16 %v19
    %v63 = vunpack.c.l.b16 %v20
    %v64 = vunpack.c.l.b16 %v21
    %v65 = vunpack.c.l.b16 %v22
    %v66 = vunpack.c.l.b16 %v23
    %v67 = vunpack.c.l.b16 %v24
    %v68 = vunpack.c.l.b16 %v25
    %v69 = vunpack.c.l.b16 %v26
    %v70 = vunpack.c.l.b16 %v27
    %v71 = vunpack.c.l.b16 %v28
    %v72 = vunpack.c.l.b16 %v29
    %v73 = vunpack.c.l.b16 %v30
    %v74 = vunpack.c.l.b16 %v31
    %v75 = vpack.c.b16 %v60, %v59
    %v76 = vpack.c.b16 %v62, %v61
    %v77 = vpack.c.b16 %v64, %v63
    %v78 = vpack.c.b16 %v66, %v65
    %v79 = vpack.c.b16 %v68, %v67
    %v80 = vpack.c.b16 %v70, %v69
    %v81 = vpack.c.b16 %v72, %v71
    %v82 = vpack.c.b16 %v74, %v73
    %v87 = vunpack.c.l.b16 %v32
    %v88 = vunpack.c.l.b16 %v33
    %v89 = vunpack.c.l.b16 %v34
    %v90 = vunpack.c.l.b16 %v35
    %v91 = vpack.c.b16 %v88, %v87
    %v92 = vpack.c.b16 %v90, %v89
    %vm94 = vcmask 220160
    %v96 = vsel %vm94, %v75, 0
    %v99 = vsel %vm94, %v76, 0
    %v102 = vsel %vm94, %v77, 0
    %v105 = vsel %vm94, %v78, 0
    %v108 = vsel %vm94, %v79, 0
    %v111 = vsel %vm94, %v80, 0
    %v114 = vsel %vm94, %v81, 0
    %v117 = vsel %vm94, %v82, 0
    %vm119 = vcmask 1044480
    %vm120 = vcmask 1045504
    %v121 = vsel %vm119, 4294967295, 65535
    %v122 = vsel %vm120, %v121, 0
    %v124 = vand.u32 %v92, %v122
    %126 = vmatprep.subr.bf16.mxu0 0
    %127 = vmatpush1.bf16.msra.mxu0 %v91
    %128 = vmatprep.subr.bf16.mxu0 0
    %129 = vmatpush1.bf16.msra.mxu0 %v124
    %130 = vmatprep.subr.bf16.mxu0 0
    %131 = vmatpush1.bf16.msra.mxu0 0
    %132 = vmatprep.subr.bf16.mxu0 0
    %133 = vmatpush1.bf16.msra.mxu0 0
    %134 = vmatprep.subr.bf16.mxu0 0
    %135 = vmatpush1.bf16.msra.mxu0 0
    %136 = vmatprep.subr.bf16.mxu0 0
    %137 = vmatpush1.bf16.msra.mxu0 0
    %138 = vmatprep.subr.bf16.mxu0 0
    %139 = vmatpush1.bf16.msra.mxu0 0
    %140 = vmatprep.subr.bf16.mxu0 0
    %141 = vmatpush1.bf16.msra.mxu0 0
    %142 = vmatprep.subr.bf16.mxu0 0
    %143 = vmatpush1.bf16.msra.mxu0 0
    %144 = vmatprep.subr.bf16.mxu0 0
    %145 = vmatpush1.bf16.msra.mxu0 0
    %146 = vmatprep.subr.bf16.mxu0 0
    %147 = vmatpush1.bf16.msra.mxu0 0
    %148 = vmatprep.subr.bf16.mxu0 0
    %149 = vmatpush1.bf16.msra.mxu0 0
    %150 = vmatprep.subr.bf16.mxu0 0
    %151 = vmatpush1.bf16.msra.mxu0 0
    %152 = vmatprep.subr.bf16.mxu0 0
    %153 = vmatpush1.bf16.msra.mxu0 0
    %154 = vmatprep.subr.bf16.mxu0 0
    %155 = vmatpush1.bf16.msra.mxu0 0
    %156 = vmatprep.subr.bf16.mxu0 0
    %157 = vmatpush1.bf16.msra.mxu0 0
    %158 = vmatprep.mubr.bf16.mxu0 0
    %159 = vmatmul.mubr.bf16.gmra.mrb[0].mxu0 %v96
    %v160 = vpop.f32.mrb[0].mxu0
    %v161 = vadd.f32 %v41, %v160
    %v162 = vpop.f32.mrb[0].mxu0
    %v163 = vpop.f32.mrb[0].mxu0
    %v164 = vadd.f32 %v41, %v163
    %v165 = vpop.f32.mrb[0].mxu0
    %166 = vmatprep.mubr.bf16.mxu0 0
    %167 = vmatmul.mubr.bf16.gmra.mrb[0].mxu0 %v99
    %v168 = vpop.f32.mrb[0].mxu0
    %v169 = vadd.f32 %v41, %v168
    %v170 = vpop.f32.mrb[0].mxu0
    %v171 = vpop.f32.mrb[0].mxu0
    %v172 = vadd.f32 %v41, %v171
    %v173 = vpop.f32.mrb[0].mxu0
    %174 = vmatprep.mubr.bf16.mxu0 0
    %175 = vmatmul.mubr.bf16.gmra.mrb[0].mxu0 %v102
    %v176 = vpop.f32.mrb[0].mxu0
    %v177 = vadd.f32 %v41, %v176
    %v178 = vpop.f32.mrb[0].mxu0
    %v179 = vpop.f32.mrb[0].mxu0
    %v180 = vadd.f32 %v41, %v179
    %v181 = vpop.f32.mrb[0].mxu0
    %182 = vmatprep.mubr.bf16.mxu0 0
    %183 = vmatmul.mubr.bf16.gmra.mrb[0].mxu0 %v105
    %v184 = vpop.f32.mrb[0].mxu0
    %v185 = vadd.f32 %v41, %v184
    %v186 = vpop.f32.mrb[0].mxu0
    %v187 = vpop.f32.mrb[0].mxu0
    %v188 = vadd.f32 %v41, %v187
    %v189 = vpop.f32.mrb[0].mxu0
    %190 = vmatprep.mubr.bf16.mxu0 0
    %191 = vmatmul.mubr.bf16.gmra.mrb[0].mxu0 %v108
    %v192 = vpop.f32.mrb[0].mxu0
    %v193 = vadd.f32 %v41, %v192
    %v194 = vpop.f32.mrb[0].mxu0
    %v195 = vpop.f32.mrb[0].mxu0
    %v196 = vadd.f32 %v41, %v195
    %v197 = vpop.f32.mrb[0].mxu0
    %198 = vmatprep.mubr.bf16.mxu0 0
    %199 = vmatmul.mubr.bf16.gmra.mrb[0].mxu0 %v111
    %v200 = vpop.f32.mrb[0].mxu0
    %v201 = vadd.f32 %v41, %v200
    %v202 = vpop.f32.mrb[0].mxu0
    %v203 = vpop.f32.mrb[0].mxu0
    %v204 = vadd.f32 %v41, %v203
    %v205 = vpop.f32.mrb[0].mxu0
    %206 = vmatprep.mubr.bf16.mxu0 0
    %207 = vmatmul.mubr.bf16.gmra.mrb[0].mxu0 %v114
    %v208 = vpop.f32.mrb[0].mxu0
    %v209 = vadd.f32 %v41, %v208
    %v210 = vpop.f32.mrb[0].mxu0
    %v211 = vpop.f32.mrb[0].mxu0
    %v212 = vadd.f32 %v41, %v211
    %v213 = vpop.f32.mrb[0].mxu0
    %214 = vmatprep.mubr.bf16.mxu0 0
    %215 = vmatmul.mubr.bf16.gmra.mrb[0].mxu0 %v117
    %v216 = vpop.f32.mrb[0].mxu0
    %v217 = vadd.f32 %v41, %v216
    %v218 = vpop.f32.mrb[0].mxu0
    %v219 = vpop.f32.mrb[0].mxu0
    %v220 = vadd.f32 %v41, %v219
    %v221 = vpop.f32.mrb[0].mxu0
    %222 = vdwg.mxu0
    %v223 = vmax.f32 %v161, 0.0
    %v224 = vmax.f32 %v164, 0.0
    %v225 = vmax.f32 %v169, 0.0
    %v226 = vmax.f32 %v172, 0.0
    %v227 = vmax.f32 %v177, 0.0
    %v228 = vmax.f32 %v180, 0.0
    %v229 = vmax.f32 %v185, 0.0
    %v230 = vmax.f32 %v188, 0.0
    %v231 = vmax.f32 %v193, 0.0
    %v232 = vmax.f32 %v196, 0.0
    %v233 = vmax.f32 %v201, 0.0
    %v234 = vmax.f32 %v204, 0.0
    %v235 = vmax.f32 %v209, 0.0
    %v236 = vmax.f32 %v212, 0.0
    %v237 = vmax.f32 %v217, 0.0
    %v238 = vmax.f32 %v220, 0.0
    %v239 = vpack.c.bf16 %v224, %v223
    %v240 = vpack.c.bf16 %v226, %v225
    %v241 = vpack.c.bf16 %v228, %v227
    %v242 = vpack.c.bf16 %v230, %v229
    %v243 = vpack.c.bf16 %v232, %v231
    %v244 = vpack.c.bf16 %v234, %v233
    %v245 = vpack.c.bf16 %v236, %v235
    %v246 = vpack.c.bf16 %v238, %v237
    %v255 = vunpack.c.l.b16 %v239
    %v256 = vunpack.c.h.b16 %v239
    %v257 = vunpack.c.l.b16 %v240
    %v258 = vunpack.c.h.b16 %v240
    %v259 = vunpack.c.l.b16 %v241
    %v260 = vunpack.c.h.b16 %v241
    %v261 = vunpack.c.l.b16 %v242
    %v262 = vunpack.c.h.b16 %v242
    %v263 = vunpack.c.l.b16 %v243
    %v264 = vunpack.c.h.b16 %v243
    %v265 = vunpack.c.l.b16 %v244
    %v266 = vunpack.c.h.b16 %v244
    %v267 = vunpack.c.l.b16 %v245
    %v268 = vunpack.c.h.b16 %v245
    %v269 = vunpack.c.l.b16 %v246
    %v270 = vunpack.c.h.b16 %v246
    %v271 = vpack.c.b16 %v255, %v255
    %v272 = vpack.c.b16 %v256, %v256
    %v273 = vpack.c.b16 %v257, %v257
    %v274 = vpack.c.b16 %v258, %v258
    %v275 = vpack.c.b16 %v259, %v259
    %v276 = vpack.c.b16 %v260, %v260
    %v277 = vpack.c.b16 %v261, %v261
    %v278 = vpack.c.b16 %v262, %v262
    %v279 = vpack.c.b16 %v263, %v263
    %v280 = vpack.c.b16 %v264, %v264
    %v281 = vpack.c.b16 %v265, %v265
    %v282 = vpack.c.b16 %v266, %v266
    %v283 = vpack.c.b16 %v267, %v267
    %v284 = vpack.c.b16 %v268, %v268
    %v285 = vpack.c.b16 %v269, %v269
    %v286 = vpack.c.b16 %v270, %v270
    %303 = vst [vmem:[#allocation2] sm:$0xf] %v271
    %304 = vst [vmem:[#allocation2 + $0x4] sm:$0xf] %v272
    %305 = vst [vmem:[#allocation2 + $0x8] sm:$0xf] %v273
    %306 = vst [vmem:[#allocation2 + $0xc] sm:$0xf] %v274
    %307 = vst [vmem:[#allocation2 + $0x10] sm:$0xf] %v275
    %308 = vst [vmem:[#allocation2 + $0x14] sm:$0xf] %v276
    %309 = vst [vmem:[#allocation2 + $0x18] sm:$0xf] %v277
    %310 = vst [vmem:[#allocation2 + $0x1c] sm:$0xf] %v278
    %311 = vst [vmem:[#allocation2 + $0x20] sm:$0xf] %v279
    %312 = vst [vmem:[#allocation2 + $0x24] sm:$0xf] %v280
    %313 = vst [vmem:[#allocation2 + $0x28] sm:$0xf] %v281
    %314 = vst [vmem:[#allocation2 + $0x2c] sm:$0xf] %v282
    %315 = vst [vmem:[#allocation2 + $0x30] sm:$0xf] %v283
    %316 = vst [vmem:[#allocation2 + $0x34] sm:$0xf] %v284
    %317 = vst [vmem:[#allocation2 + $0x38] sm:$0xf] %v285
    %318 = vst [vmem:[#allocation2 + $0x3c] sm:$0xf] %v286
    // Predicated region
    $region14: #{tpu_custom_call.1} parent=1 // pred_check
      _
    $region15: #{tpu_custom_call.1} parent=1 // pred_check_branch
      %320 = sbr.rel (0) target = $region17
    $region16: #{tpu_custom_call.1} parent=1 // pred_region
      %s322 = ssub.s32 1024, 1024
      %323 = vsyncadd [#allocation3], %s322
      %s324 = sshll.u32 [#allocation2], 4
      %s325 = int_to_ptr.vmem [resolvable:$true] %s324
      %330 = dma.vmem_to_hbm [thread:$0]  %s325, 1024, %s3, [#allocation3], 64, 64, 4
    $region17: #{tpu_custom_call.1} parent=1 // pred_fallthru
      _
    // Predicated region
    $region18: #{tpu_custom_call.1} parent=1 // pred_check
      _
    $region19: #{tpu_custom_call.1} parent=1 // pred_check_branch
      %332 = sbr.rel (0) target = $region21
    $region20: #{tpu_custom_call.1} parent=1 // pred_region
      %333 = dma.done [#allocation3], 1024
    $region21: #{tpu_custom_call.1} parent=1 // pred_fallthru
      _
    %334 = vsyncpa [#allocation3], 1

</llo_original>
